<compile_context>
chip_gen: v5e
topology: v5e:2x2
jax: 0.10.0
libtpu: 0.0.40
codegen_flags: <defaults>
</compile_context>

<pallas_src>
import jax
import jax.numpy as jnp
from jax.experimental import pallas as pl
from jax.experimental.pallas import tpu as pltpu

THRESH = 1.0
LANE = 128


def _round_up(n, m):
    return (n + m - 1) // m * m


def bcdae_kernel(x_ref, we1_ref, be1_ref, we2_ref, be2_ref,
                 wd1_ref, bd1_ref, wd2_ref, bd2_ref, noise_ref,
                 out_ref, spikes_ref, mem_ref):
    bf16 = jnp.bfloat16
    x = x_ref[...].astype(bf16)

    # --- encoder: Linear -> ReLU -> Linear -> ReLU (bf16 MXU, f32 accum) ---
    h1 = jnp.dot(x, we1_ref[...], preferred_element_type=jnp.float32) + be1_ref[...]
    h1 = jnp.maximum(h1, 0.0)
    h2 = jnp.dot(h1.astype(bf16), we2_ref[...],
                 preferred_element_type=jnp.float32) + be2_ref[...]
    h2 = jnp.maximum(h2, 0.0)

    # --- mem_update: add per-feature noise, threshold (ActFun) ---
    mem = h2 + noise_ref[...]                       # (1, Hp) broadcast over batch
    spikes = (mem > THRESH).astype(jnp.float32)     # padded lanes never spike

    # --- decoder: Linear -> ReLU -> Linear -> Sigmoid ---
    d1 = jnp.dot(spikes.astype(bf16), wd1_ref[...],
                 preferred_element_type=jnp.float32) + bd1_ref[...]
    d1 = jnp.maximum(d1, 0.0)
    logits = jnp.dot(d1.astype(bf16), wd2_ref[...],
                     preferred_element_type=jnp.float32) + bd2_ref[...]
    out_ref[...] = jax.nn.sigmoid(logits)           # exp on EUP, slot has slack

    # Write spikes/mem at true width H (static slice of the padded compute).
    H = spikes_ref.shape[-1]
    spikes_ref[...] = spikes[:, :H]
    mem_ref[...] = mem[:, :H]


def bcdae_forward(x, params, noise, hidden_size, *, tile_b=1024):
    """x: (B, input_size), any float dtype (bf16 preferred if producer allows);
    noise: (1, hidden_size) f32.  params as produced by init_params().

    Returns (reconstruction (B, D) f32, spikes (B, H) f32, mem (B, H) f32).
    """
    B, D = x.shape
    H = hidden_size
    H2p = params["we1"].shape[1]          # padded hidden*2
    Hp = params["we2"].shape[1]           # padded hidden

    noise_p = jnp.pad(noise.astype(jnp.float32),
                      ((0, 0), (0, Hp - noise.shape[1])))

    # --- batch tile selection -------------------------------------------------
    # Rules: multiple of 8 (or equal to B if B < 8); capped so the grid has
    # >= 2 steps (v7x dual-TC sharding; negligible cost on 1-TC chips).
    if B <= 8:
        tb = B                                    # single block == full dim
    else:
        tb = min(tile_b, B)
        tb = min(tb, _round_up(pl.cdiv(B, 2), 8))  # >= 2 grid steps
        tb = max(8, (tb // 8) * 8)                 # multiple of 8
    grid = (pl.cdiv(B, tb),)

    row = lambda feat: pl.BlockSpec((tb, feat), lambda i: (i, 0))
    full = lambda arr: pl.BlockSpec(arr.shape, lambda i: (0, 0))

    in_specs = [
        row(D),                                   # x (batch-tiled)
        full(params["we1"]), full(params["be1"]),
        full(params["we2"]), full(params["be2"]),
        full(params["wd1"]), full(params["bd1"]),
        full(params["wd2"]), full(params["bd2"]),
        full(noise_p),
    ]
    # Outputs at true widths: reconstruction (B, D), spikes/mem (B, H).
    out_specs = (row(D), row(H), row(H))
    out_shapes = (
        jax.ShapeDtypeStruct((B, D), jnp.float32),   # reconstruction
        jax.ShapeDtypeStruct((B, H), jnp.float32),   # spikes (unpadded)
        jax.ShapeDtypeStruct((B, H), jnp.float32),   # mem (unpadded)
    )

    # --- cost estimate (helps XLA overlap this mem-bound call) ---------------
    def _bytes(a):
        return int(a.size) * a.dtype.itemsize

    weight_bytes = sum(_bytes(params[k]) for k in
                       ("we1", "be1", "we2", "be2", "wd1", "bd1", "wd2", "bd2"))
    bytes_accessed = (_bytes(x) + weight_bytes + _bytes(noise_p)
                      + B * D * 4        # out (f32)
                      + 2 * B * H * 4)   # spikes + mem (f32)
    flops = 2 * B * (D * H2p + H2p * Hp + Hp * H2p + H2p * D)
    cost = pl.CostEstimate(flops=flops, transcendentals=B * D,
                           bytes_accessed=bytes_accessed)

    out, spikes, mem = pl.pallas_call(
        bcdae_kernel,
        out_shape=out_shapes,
        grid=grid,
        in_specs=in_specs,
        out_specs=out_specs,
        compiler_params=pltpu.CompilerParams(
            dimension_semantics=("parallel",)),
        cost_estimate=cost,
    )(x,                                            # pass caller's dtype through
      params["we1"], params["be1"], params["we2"], params["be2"],
      params["wd1"], params["bd1"], params["wd2"], params["bd2"], noise_p)

    return out, spikes, mem


def init_params(key, input_size, hidden_size):
    """nn.Linear default init (uniform +/- 1/sqrt(fan_in)).

    Weights stored (in_features, out_features), zero-padded along the hidden
    dims to a multiple of 128 lanes, cast to bf16.  Biases f32, zero-padded.
    Padding is semantics-preserving: padded weight/bias/noise entries are 0,
    ReLU(0)=0 and 0 > thresh is False, so padded lanes never spike and never
    feed the decoder.
    """
    ks = jax.random.split(key, 8)
    D, H, H2 = input_size, hidden_size, hidden_size * 2
    Hp = max(LANE, _round_up(H, LANE))
    H2p = max(LANE, _round_up(H2, LANE))

    def lin(kw, kb, fan_in, fan_out, pad_in, pad_out):
        bound = 1.0 / jnp.sqrt(fan_in)
        w = jax.random.uniform(kw, (fan_in, fan_out), jnp.float32, -bound, bound)
        b = jax.random.uniform(kb, (1, fan_out), jnp.float32, -bound, bound)
        w = jnp.pad(w, ((0, pad_in - fan_in), (0, pad_out - fan_out)))
        b = jnp.pad(b, ((0, 0), (0, pad_out - fan_out)))
        return w.astype(jnp.bfloat16), b

    we1, be1 = lin(ks[0], ks[1], D, H2, D, H2p)
    we2, be2 = lin(ks[2], ks[3], H2, H, H2p, Hp)
    wd1, bd1 = lin(ks[4], ks[5], H, H2, Hp, H2p)
    wd2, bd2 = lin(ks[6], ks[7], H2, D, H2p, D)
    return dict(we1=we1, be1=be1, we2=we2, be2=be2,
                wd1=wd1, bd1=bd1, wd2=wd2, bd2=bd2)


def bcdae_reference(x, p, noise, hidden_size):
    """Pure-JAX reference mirroring the kernel's bf16-operand / f32-accum math."""
    bf16 = jnp.bfloat16
    Hp = p["we2"].shape[1]
    noise_p = jnp.pad(noise, ((0, 0), (0, Hp - noise.shape[1])))
    h1 = jnp.maximum(jnp.dot(x.astype(bf16), p["we1"],
                             preferred_element_type=jnp.float32) + p["be1"], 0.0)
    h2 = jnp.maximum(jnp.dot(h1.astype(bf16), p["we2"],
                             preferred_element_type=jnp.float32) + p["be2"], 0.0)
    mem = h2 + noise_p
    spikes = (mem > THRESH).astype(jnp.float32)
    d1 = jnp.maximum(jnp.dot(spikes.astype(bf16), p["wd1"],
                             preferred_element_type=jnp.float32) + p["bd1"], 0.0)
    logits = jnp.dot(d1.astype(bf16), p["wd2"],
                     preferred_element_type=jnp.float32) + p["bd2"]
    out = jax.nn.sigmoid(logits)
    return out, spikes[:, :hidden_size], mem[:, :hidden_size]


if __name__ == "__main__":
    key = jax.random.PRNGKey(0)
    k_param, k_x, k_noise = jax.random.split(key, 3)

    batch, input_size, hidden_size = 32, 256, 32   # e.g. flattened 16x16 images

    params = init_params(k_param, input_size, hidden_size)
    x = jax.random.uniform(k_x, (batch, input_size), jnp.float32)
    # noise ~ torch.rand(hidden_size,), broadcast over batch (kept as (1, H))
    noise = jax.random.uniform(k_noise, (1, hidden_size), jnp.float32)

    # Default tiling: the >=2-grid-step cap yields grid=(2,) here (tb=16),
    # exercising the multi-step batch grid / dual-TC path.
    out, spikes, mem = bcdae_forward(x, params, noise, hidden_size)
    jax.block_until_ready((out, spikes, mem))

    out_r, spikes_r, mem_r = bcdae_reference(x, params, noise, hidden_size)
    assert out.shape == (batch, input_size)
    assert spikes.shape == (batch, hidden_size)
    assert mem.shape == (batch, hidden_size)
    assert jnp.allclose(out, out_r, atol=2e-3), "reconstruction mismatch"
    assert jnp.allclose(spikes, spikes_r), "spike mismatch"
    assert jnp.allclose(mem, mem_r, atol=2e-3), "mem mismatch"

    print("KERNEL_OK")
</pallas_src>

<mosaic_0001>
module attributes {stable_mosaic.version = 11 : i64} {
  func.func @bcdae_kernel(%arg0: i32, %arg1: memref<16x256xf32, #tpu.memory_space<vmem>>, %arg2: memref<256x128xbf16, #tpu.memory_space<vmem>>, %arg3: memref<1x128xf32, #tpu.memory_space<vmem>>, %arg4: memref<128x128xbf16, #tpu.memory_space<vmem>>, %arg5: memref<1x128xf32, #tpu.memory_space<vmem>>, %arg6: memref<128x128xbf16, #tpu.memory_space<vmem>>, %arg7: memref<1x128xf32, #tpu.memory_space<vmem>>, %arg8: memref<128x256xbf16, #tpu.memory_space<vmem>>, %arg9: memref<1x256xf32, #tpu.memory_space<vmem>>, %arg10: memref<1x128xf32, #tpu.memory_space<vmem>>, %arg11: memref<16x256xf32, #tpu.memory_space<vmem>>, %arg12: memref<16x32xf32, #tpu.memory_space<vmem>>, %arg13: memref<16x32xf32, #tpu.memory_space<vmem>>) attributes {dimension_semantics = [#tpu.dimension_semantics<parallel>], iteration_bounds = array<i64: 2>, scalar_prefetch = 0 : i64, scratch_operands = 0 : i64, tpu.core_type = #tpu.core_type<tc>, window_params = [{transform_indices = @transform_0, window_bounds = array<i64: 16, 256>}, {pipeline_mode = #tpu.pipeline_mode<synchronous>, transform_indices = @transform_1, window_bounds = array<i64: 256, 128>}, {pipeline_mode = #tpu.pipeline_mode<synchronous>, transform_indices = @transform_2, window_bounds = array<i64: 1, 128>}, {pipeline_mode = #tpu.pipeline_mode<synchronous>, transform_indices = @transform_3, window_bounds = array<i64: 128, 128>}, {pipeline_mode = #tpu.pipeline_mode<synchronous>, transform_indices = @transform_4, window_bounds = array<i64: 1, 128>}, {pipeline_mode = #tpu.pipeline_mode<synchronous>, transform_indices = @transform_5, window_bounds = array<i64: 128, 128>}, {pipeline_mode = #tpu.pipeline_mode<synchronous>, transform_indices = @transform_6, window_bounds = array<i64: 1, 128>}, {pipeline_mode = #tpu.pipeline_mode<synchronous>, transform_indices = @transform_7, window_bounds = array<i64: 128, 256>}, {pipeline_mode = #tpu.pipeline_mode<synchronous>, transform_indices = @transform_8, window_bounds = array<i64: 1, 256>}, {pipeline_mode = #tpu.pipeline_mode<synchronous>, transform_indices = @transform_9, window_bounds = array<i64: 1, 128>}, {transform_indices = @transform_10, window_bounds = array<i64: 16, 256>}, {transform_indices = @transform_11, window_bounds = array<i64: 16, 32>}, {transform_indices = @transform_12, window_bounds = array<i64: 16, 32>}]} {
    %c0 = arith.constant 0 : index
    %c0_0 = arith.constant 0 : index
    %0 = vector.load %arg1[%c0, %c0_0] : memref<16x256xf32, #tpu.memory_space<vmem>>, vector<16x256xf32>
    %1 = arith.truncf %0 : vector<16x256xf32> to vector<16x256xbf16>
    %c0_1 = arith.constant 0 : index
    %c0_2 = arith.constant 0 : index
    %2 = vector.load %arg2[%c0_1, %c0_2] : memref<256x128xbf16, #tpu.memory_space<vmem>>, vector<256x128xbf16>
    %cst = arith.constant dense<0.000000e+00> : vector<16x128xf32>
    %3 = tpu.matmul %1, %2, %cst {dimension_numbers = #tpu.dot_dimension_numbers<[1], [0], [0], [1], [0, 0, 1, 1], [], []>} : vector<16x256xbf16>, vector<256x128xbf16>, vector<16x128xf32> -> vector<16x128xf32>
    %c0_3 = arith.constant 0 : index
    %c0_4 = arith.constant 0 : index
    %4 = vector.load %arg3[%c0_3, %c0_4] : memref<1x128xf32, #tpu.memory_space<vmem>>, vector<1x128xf32>
    %5 = vector.broadcast %4 : vector<1x128xf32> to vector<16x128xf32>
    %6 = arith.addf %3, %5 : vector<16x128xf32>
    %cst_5 = arith.constant 0.000000e+00 : f32
    %7 = vector.broadcast %cst_5 : f32 to vector<16x128xf32>
    %8 = arith.maximumf %6, %7 : vector<16x128xf32>
    %9 = arith.truncf %8 : vector<16x128xf32> to vector<16x128xbf16>
    %c0_6 = arith.constant 0 : index
    %c0_7 = arith.constant 0 : index
    %10 = vector.load %arg4[%c0_6, %c0_7] : memref<128x128xbf16, #tpu.memory_space<vmem>>, vector<128x128xbf16>
    %cst_8 = arith.constant dense<0.000000e+00> : vector<16x128xf32>
    %11 = tpu.matmul %9, %10, %cst_8 {dimension_numbers = #tpu.dot_dimension_numbers<[1], [0], [0], [1], [0, 0, 1, 1], [], []>} : vector<16x128xbf16>, vector<128x128xbf16>, vector<16x128xf32> -> vector<16x128xf32>
    %c0_9 = arith.constant 0 : index
    %c0_10 = arith.constant 0 : index
    %12 = vector.load %arg5[%c0_9, %c0_10] : memref<1x128xf32, #tpu.memory_space<vmem>>, vector<1x128xf32>
    %13 = vector.broadcast %12 : vector<1x128xf32> to vector<16x128xf32>
    %14 = arith.addf %11, %13 : vector<16x128xf32>
    %cst_11 = arith.constant 0.000000e+00 : f32
    %15 = vector.broadcast %cst_11 : f32 to vector<16x128xf32>
    %16 = arith.maximumf %14, %15 : vector<16x128xf32>
    %c0_12 = arith.constant 0 : index
    %c0_13 = arith.constant 0 : index
    %17 = vector.load %arg10[%c0_12, %c0_13] : memref<1x128xf32, #tpu.memory_space<vmem>>, vector<1x128xf32>
    %18 = vector.broadcast %17 : vector<1x128xf32> to vector<16x128xf32>
    %19 = arith.addf %16, %18 : vector<16x128xf32>
    %cst_14 = arith.constant 1.000000e+00 : f32
    %20 = vector.broadcast %cst_14 : f32 to vector<16x128xf32>
    %21 = arith.cmpf ogt, %19, %20 : vector<16x128xf32>
    %22 = arith.extui %21 : vector<16x128xi1> to vector<16x128xi32>
    %23 = arith.sitofp %22 : vector<16x128xi32> to vector<16x128xf32>
    %24 = arith.truncf %23 : vector<16x128xf32> to vector<16x128xbf16>
    %c0_15 = arith.constant 0 : index
    %c0_16 = arith.constant 0 : index
    %25 = vector.load %arg6[%c0_15, %c0_16] : memref<128x128xbf16, #tpu.memory_space<vmem>>, vector<128x128xbf16>
    %cst_17 = arith.constant dense<0.000000e+00> : vector<16x128xf32>
    %26 = tpu.matmul %24, %25, %cst_17 {dimension_numbers = #tpu.dot_dimension_numbers<[1], [0], [0], [1], [0, 0, 1, 1], [], []>} : vector<16x128xbf16>, vector<128x128xbf16>, vector<16x128xf32> -> vector<16x128xf32>
    %c0_18 = arith.constant 0 : index
    %c0_19 = arith.constant 0 : index
    %27 = vector.load %arg7[%c0_18, %c0_19] : memref<1x128xf32, #tpu.memory_space<vmem>>, vector<1x128xf32>
    %28 = vector.broadcast %27 : vector<1x128xf32> to vector<16x128xf32>
    %29 = arith.addf %26, %28 : vector<16x128xf32>
    %cst_20 = arith.constant 0.000000e+00 : f32
    %30 = vector.broadcast %cst_20 : f32 to vector<16x128xf32>
    %31 = arith.maximumf %29, %30 : vector<16x128xf32>
    %32 = arith.truncf %31 : vector<16x128xf32> to vector<16x128xbf16>
    %c0_21 = arith.constant 0 : index
    %c0_22 = arith.constant 0 : index
    %33 = vector.load %arg8[%c0_21, %c0_22] : memref<128x256xbf16, #tpu.memory_space<vmem>>, vector<128x256xbf16>
    %cst_23 = arith.constant dense<0.000000e+00> : vector<16x256xf32>
    %34 = tpu.matmul %32, %33, %cst_23 {dimension_numbers = #tpu.dot_dimension_numbers<[1], [0], [0], [1], [0, 0, 1, 1], [], []>} : vector<16x128xbf16>, vector<128x256xbf16>, vector<16x256xf32> -> vector<16x256xf32>
    %c0_24 = arith.constant 0 : index
    %c0_25 = arith.constant 0 : index
    %35 = vector.load %arg9[%c0_24, %c0_25] : memref<1x256xf32, #tpu.memory_space<vmem>>, vector<1x256xf32>
    %36 = vector.broadcast %35 : vector<1x256xf32> to vector<16x256xf32>
    %37 = arith.addf %34, %36 : vector<16x256xf32>
    %38 = arith.negf %37 : vector<16x256xf32>
    %39 = math.exp %38 : vector<16x256xf32>
    %cst_26 = arith.constant 1.000000e+00 : f32
    %40 = vector.broadcast %cst_26 : f32 to vector<16x256xf32>
    %41 = arith.addf %40, %39 : vector<16x256xf32>
    %42 = arith.divf %40, %41 : vector<16x256xf32>
    %c0_27 = arith.constant 0 : index
    %c0_28 = arith.constant 0 : index
    %43 = vector.load %arg11[%c0_27, %c0_28] : memref<16x256xf32, #tpu.memory_space<vmem>>, vector<16x256xf32>
    tpu.vector_store %arg11[%c0_27, %c0_28], %42 {strides = array<i32>} : memref<16x256xf32, #tpu.memory_space<vmem>>, vector<16x256xf32>,
    %44 = vector.extract_strided_slice %23 {offsets = [0, 0], sizes = [16, 32], strides = [1, 1]} : vector<16x128xf32> to vector<16x32xf32>
    %c0_29 = arith.constant 0 : index
    %c0_30 = arith.constant 0 : index
    %45 = vector.load %arg12[%c0_29, %c0_30] : memref<16x32xf32, #tpu.memory_space<vmem>>, vector<16x32xf32>
    tpu.vector_store %arg12[%c0_29, %c0_30], %44 {strides = array<i32>} : memref<16x32xf32, #tpu.memory_space<vmem>>, vector<16x32xf32>,
    %46 = vector.extract_strided_slice %19 {offsets = [0, 0], sizes = [16, 32], strides = [1, 1]} : vector<16x128xf32> to vector<16x32xf32>
    %c0_31 = arith.constant 0 : index
    %c0_32 = arith.constant 0 : index
    %47 = vector.load %arg13[%c0_31, %c0_32] : memref<16x32xf32, #tpu.memory_space<vmem>>, vector<16x32xf32>
    tpu.vector_store %arg13[%c0_31, %c0_32], %46 {strides = array<i32>} : memref<16x32xf32, #tpu.memory_space<vmem>>, vector<16x32xf32>,
    return
  }
  func.func @transform_0(%arg0: i32) -> (i32, i32) {
    %c0_i32 = arith.constant 0 : i32
    %c0_i32_0 = arith.constant 0 : i32
    return %arg0, %c0_i32 : i32, i32
  }
  func.func @transform_1(%arg0: i32) -> (i32, i32) {
    %c0_i32 = arith.constant 0 : i32
    %c0_i32_0 = arith.constant 0 : i32
    %c0_i32_1 = arith.constant 0 : i32
    return %c0_i32, %c0_i32_0 : i32, i32
  }
  func.func @transform_2(%arg0: i32) -> (i32, i32) {
    %c0_i32 = arith.constant 0 : i32
    %c0_i32_0 = arith.constant 0 : i32
    %c0_i32_1 = arith.constant 0 : i32
    return %c0_i32, %c0_i32_0 : i32, i32
  }
  func.func @transform_3(%arg0: i32) -> (i32, i32) {
    %c0_i32 = arith.constant 0 : i32
    %c0_i32_0 = arith.constant 0 : i32
    %c0_i32_1 = arith.constant 0 : i32
    return %c0_i32, %c0_i32_0 : i32, i32
  }
  func.func @transform_4(%arg0: i32) -> (i32, i32) {
    %c0_i32 = arith.constant 0 : i32
    %c0_i32_0 = arith.constant 0 : i32
    %c0_i32_1 = arith.constant 0 : i32
    return %c0_i32, %c0_i32_0 : i32, i32
  }
  func.func @transform_5(%arg0: i32) -> (i32, i32) {
    %c0_i32 = arith.constant 0 : i32
    %c0_i32_0 = arith.constant 0 : i32
    %c0_i32_1 = arith.constant 0 : i32
    return %c0_i32, %c0_i32_0 : i32, i32
  }
  func.func @transform_6(%arg0: i32) -> (i32, i32) {
    %c0_i32 = arith.constant 0 : i32
    %c0_i32_0 = arith.constant 0 : i32
    %c0_i32_1 = arith.constant 0 : i32
    return %c0_i32, %c0_i32_0 : i32, i32
  }
  func.func @transform_7(%arg0: i32) -> (i32, i32) {
    %c0_i32 = arith.constant 0 : i32
    %c0_i32_0 = arith.constant 0 : i32
    %c0_i32_1 = arith.constant 0 : i32
    return %c0_i32, %c0_i32_0 : i32, i32
  }
  func.func @transform_8(%arg0: i32) -> (i32, i32) {
    %c0_i32 = arith.constant 0 : i32
    %c0_i32_0 = arith.constant 0 : i32
    %c0_i32_1 = arith.constant 0 : i32
    return %c0_i32, %c0_i32_0 : i32, i32
  }
  func.func @transform_9(%arg0: i32) -> (i32, i32) {
    %c0_i32 = arith.constant 0 : i32
    %c0_i32_0 = arith.constant 0 : i32
    %c0_i32_1 = arith.constant 0 : i32
    return %c0_i32, %c0_i32_0 : i32, i32
  }
  func.func @transform_10(%arg0: i32) -> (i32, i32) {
    %c0_i32 = arith.constant 0 : i32
    %c0_i32_0 = arith.constant 0 : i32
    return %arg0, %c0_i32 : i32, i32
  }
  func.func @transform_11(%arg0: i32) -> (i32, i32) {
    %c0_i32 = arith.constant 0 : i32
    %c0_i32_0 = arith.constant 0 : i32
    return %arg0, %c0_i32 : i32, i32
  }
  func.func @transform_12(%arg0: i32) -> (i32, i32) {
    %c0_i32 = arith.constant 0 : i32
    %c0_i32_0 = arith.constant 0 : i32
    return %arg0, %c0_i32 : i32, i32
  }
}

</mosaic_0001>

<llo_original>
// kernel: tpu_custom_call.1
$region0: #{tpu_custom_call.1}
  #allocation0 [shape = 'u32[]', space=smem, size = 0x4, offset = 0x4, fixed_abs, tag = 'smem constant byte address 0x4 - core index']
  #allocation1 [shape = 'u32[72,128]{1,0:T(1,128)}', space=vmem, size = 0x9000, scoped, tag = 'internal scratch']
  %s0 = inlined_call_operand.hbm [shape: f32[32,256], index: 0, kind: input, shape index: {}]
  %s1 = inlined_call_operand.hbm [shape: bf16[256,128], index: 1, kind: input, shape index: {}]
  %s2 = inlined_call_operand.vmem [shape: f32[1,128], index: 2, kind: input, shape index: {}]
  %s3 = inlined_call_operand.hbm [shape: bf16[128,128], index: 3, kind: input, shape index: {}]
  %s4 = inlined_call_operand.hbm [shape: f32[1,128], index: 4, kind: input, shape index: {}]
  %s5 = inlined_call_operand.hbm [shape: bf16[128,128], index: 5, kind: input, shape index: {}]
  %s6 = inlined_call_operand.vmem [shape: f32[1,128], index: 6, kind: input, shape index: {}]
  %s7 = inlined_call_operand.hbm [shape: bf16[128,256], index: 7, kind: input, shape index: {}]
  %s8 = inlined_call_operand.vmem [shape: f32[1,256], index: 8, kind: input, shape index: {}]
  %s9 = inlined_call_operand.vmem [shape: f32[1,128], index: 9, kind: input, shape index: {}]
  %s10 = inlined_call_operand.hbm [shape: f32[32,256], index: 10, kind: output, shape index: {0}]
  %s11 = inlined_call_operand.hbm [shape: f32[32,32], index: 11, kind: output, shape index: {1}]
  %s12 = inlined_call_operand.hbm [shape: f32[32,32], index: 12, kind: output, shape index: {2}]
  %13 = xla_tuple %s10, %s11, %s12
  %s14 = sld [smem:[#allocation0]]
  $region113: #{tpu_custom_call.1} parent=0
    _
  %s16 = ssub.s32 1, %s14
  %s17 = scalar_select 0, %s16, %s14
  $region1: #{tpu_custom_call.1} parent=0
    #allocation2 [shape = 'u8[32768]{0}', space=vmem, size = 0x8000, scoped, tag = 'input window, operand 0']
    #allocation3 [shape = 's32[2]{0}', space=sflag, size = 0x8, scoped, tag = 'scoped memory for tpu_custom_call.1']
    #allocation4 [shape = 's32[2]{0}', space=sflag, size = 0x8, scoped, tag = 'scoped memory for tpu_custom_call.1']
    #allocation5 [shape = 'u8[65536]{0}', space=vmem, size = 0x10000, scoped, tag = 'input window, operand 1, single buffered']
    #allocation6 [shape = 's32[1]{0}', space=sflag, size = 0x4, scoped, tag = 'scoped memory for tpu_custom_call.1']
    #allocation7 [shape = 'u8[32768]{0}', space=vmem, size = 0x8000, scoped, tag = 'input window, operand 3, single buffered']
    #allocation8 [shape = 'u8[512]{0}', space=vmem, size = 0x400, scoped, tag = 'input window, operand 4, single buffered']
    #allocation9 [shape = 's32[1]{0}', space=sflag, size = 0x4, scoped, tag = 'scoped memory for tpu_custom_call.1']
    #allocation10 [shape = 'u8[32768]{0}', space=vmem, size = 0x8000, scoped, tag = 'input window, operand 5, single buffered']
    #allocation11 [shape = 'u8[65536]{0}', space=vmem, size = 0x10000, scoped, tag = 'input window, operand 7, single buffered']
    #allocation12 [shape = 's32[1]{0}', space=sflag, size = 0x4, scoped, tag = 'scoped memory for tpu_custom_call.1']
    #allocation13 [shape = 'u8[32768]{0}', space=vmem, size = 0x8000, scoped, tag = 'output window, operand 0']
    #allocation14 [shape = 'u8[16384]{0}', space=vmem, size = 0x4000, scoped, tag = 'output window, operand 1']
    #allocation15 [shape = 's32[2]{0}', space=sflag, size = 0x8, scoped, tag = 'scoped memory for tpu_custom_call.1']
    #allocation16 [shape = 'u8[16384]{0}', space=vmem, size = 0x4000, scoped, tag = 'output window, operand 2']
    %18 = vsyncpa [#allocation3], 0
    %s19 = scalar_lea.sflag [#allocation3], 1
    %20 = vsyncpa %s19, 0
    %21 = vsyncpa [#allocation6], 0
    %22 = vsyncpa [#allocation9], 0
    %23 = vsyncpa [#allocation12], 0
    %24 = vsyncpa [#allocation4], 0
    %s25 = scalar_lea.sflag [#allocation4], 1
    %26 = vsyncpa %s25, 0
    %27 = vsyncpa [#allocation15], 0
    %s28 = scalar_lea.sflag [#allocation15], 1
    %29 = vsyncpa %s28, 0
    loop: start=0, step=1, limit=4
    $region2: #{tpu_custom_call.1} parent=1 // loop_pre_header
      _
    $region3: #{tpu_custom_call.1} parent=1 // loop_header
      %s31 = sphi 0, %s35
      %p32 = scmp.ge.s32.totalorder %s31, 4
      %s41 = sphi 0, %s43
      %s44 = sphi 0, %s41
      %s45 = sphi 0, %s44
      %s61 = sphi 0, %s45
      %s65 = sphi 0, %s65
      %s67 = sphi 0, %s65
      %s68 = sphi 0, %s67
      %s82 = sphi 0, %s68
      %s86 = sphi 0, %s86
      %s88 = sphi 0, %s86
      %s89 = sphi 0, %s88
      %s103 = sphi 0, %s89
      %s107 = sphi 0, %s107
      %s109 = sphi 0, %s107
      %s110 = sphi 0, %s109
      %s124 = sphi 0, %s110
      %s128 = sphi 0, %s128
      %s130 = sphi 0, %s128
      %s131 = sphi 0, %s130
      %s145 = sphi 0, %s131
      %s149 = sphi 0, %s149
      %s151 = sphi 0, %s149
      %s152 = sphi 0, %s151
      %s166 = sphi 0, %s152
      %s170 = sphi 0, %s170
      %s172 = sphi 0, %s170
      %s173 = sphi 0, %s172
      %s187 = sphi 0, %s173
      %s191 = sphi 0, %s191
      %s193 = sphi 0, %s191
      %s194 = sphi 0, %s193
      %s208 = sphi 0, %s194
      %s212 = sphi 0, %s212
      %s214 = sphi 0, %s212
      %s215 = sphi 0, %s214
      %s229 = sphi 0, %s215
      %s233 = sphi 0, %s233
      %s235 = sphi 0, %s233
      %s236 = sphi 0, %s235
      %s250 = sphi 0, %s236
      %s256 = sphi 0, %s258
      %s259 = sphi 0, %s256
      %s260 = sphi 0, %s259
      %s276 = sphi 0, %s260
      %s282 = sphi 0, %s284
      %s285 = sphi 0, %s282
      %s286 = sphi 0, %s285
      %s302 = sphi 0, %s286
      %s308 = sphi 0, %s310
      %s311 = sphi 0, %s308
      %s312 = sphi 0, %s311
      %s328 = sphi 0, %s312
    $region4: #{tpu_custom_call.1} parent=1 // loop_header_branch
      %34 = sbr.rel (%p32) target = $region8
    $region5: #{tpu_custom_call.1} parent=1 // loop_body
      %s36 = ssub.s32 %s31, 1
      %s37 = ssub.s32 %s31, 2
      %s38 = sadd.s32 %s31, 1
      %s39 = ssub.s32 %s31, %s38
      %p40 = scmp.eq.s32.totalorder %s39, 0
      %s42 = sadd.s32 %s41, 1
      %s43 = scalar_select %p40, %s41, %s42
      %p46 = pneg %p40
      %p47 = scmp.eq.s32.totalorder %s31, 1
      %p48 = por %p46, %p47
      %p49 = scmp.ne.s32.totalorder %s41, %s44
      %p50 = scmp.eq.s32.totalorder %s31, 0
      %p51 = por %p49, %p50
      %p52 = scmp.ne.s32.totalorder %s41, %s44
      %p53 = scmp.eq.s32.totalorder %s36, 1
      %p54 = por %p52, %p53
      %p55 = scmp.ne.s32.totalorder %s44, %s45
      %p56 = scmp.eq.s32.totalorder %s36, 0
      %p57 = por %p55, %p56
      %p58 = scmp.ne.s32.totalorder %s44, %s45
      %p59 = scmp.eq.s32.totalorder %s37, 1
      %p60 = por %p58, %p59
      %p62 = scmp.ne.s32.totalorder %s45, %s61
      %p63 = scmp.eq.s32.totalorder %s37, 0
      %p64 = por %p62, %p63
      %s66 = sadd.s32 %s65, 1
      %p69 = scmp.eq.s32.totalorder %s31, 1
      %p70 = scmp.ne.s32.totalorder %s65, %s67
      %p71 = scmp.eq.s32.totalorder %s31, 0
      %p72 = por %p70, %p71
      %p73 = scmp.ne.s32.totalorder %s65, %s67
      %p74 = scmp.eq.s32.totalorder %s36, 1
      %p75 = por %p73, %p74
      %p76 = scmp.ne.s32.totalorder %s67, %s68
      %p77 = scmp.eq.s32.totalorder %s36, 0
      %p78 = por %p76, %p77
      %p79 = scmp.ne.s32.totalorder %s67, %s68
      %p80 = scmp.eq.s32.totalorder %s37, 1
      %p81 = por %p79, %p80
      %p83 = scmp.ne.s32.totalorder %s68, %s82
      %p84 = scmp.eq.s32.totalorder %s37, 0
      %p85 = por %p83, %p84
      %s87 = sadd.s32 %s86, 1
      %p90 = scmp.eq.s32.totalorder %s31, 1
      %p91 = scmp.ne.s32.totalorder %s86, %s88
      %p92 = scmp.eq.s32.totalorder %s31, 0
      %p93 = por %p91, %p92
      %p94 = scmp.ne.s32.totalorder %s86, %s88
      %p95 = scmp.eq.s32.totalorder %s36, 1
      %p96 = por %p94, %p95
      %p97 = scmp.ne.s32.totalorder %s88, %s89
      %p98 = scmp.eq.s32.totalorder %s36, 0
      %p99 = por %p97, %p98
      %p100 = scmp.ne.s32.totalorder %s88, %s89
      %p101 = scmp.eq.s32.totalorder %s37, 1
      %p102 = por %p100, %p101
      %p104 = scmp.ne.s32.totalorder %s89, %s103
      %p105 = scmp.eq.s32.totalorder %s37, 0
      %p106 = por %p104, %p105
      %s108 = sadd.s32 %s107, 1
      %p111 = scmp.eq.s32.totalorder %s31, 1
      %p112 = scmp.ne.s32.totalorder %s107, %s109
      %p113 = scmp.eq.s32.totalorder %s31, 0
      %p114 = por %p112, %p113
      %p115 = scmp.ne.s32.totalorder %s107, %s109
      %p116 = scmp.eq.s32.totalorder %s36, 1
      %p117 = por %p115, %p116
      %p118 = scmp.ne.s32.totalorder %s109, %s110
      %p119 = scmp.eq.s32.totalorder %s36, 0
      %p120 = por %p118, %p119
      %p121 = scmp.ne.s32.totalorder %s109, %s110
      %p122 = scmp.eq.s32.totalorder %s37, 1
      %p123 = por %p121, %p122
      %p125 = scmp.ne.s32.totalorder %s110, %s124
      %p126 = scmp.eq.s32.totalorder %s37, 0
      %p127 = por %p125, %p126
      %s129 = sadd.s32 %s128, 1
      %p132 = scmp.eq.s32.totalorder %s31, 1
      %p133 = scmp.ne.s32.totalorder %s128, %s130
      %p134 = scmp.eq.s32.totalorder %s31, 0
      %p135 = por %p133, %p134
      %p136 = scmp.ne.s32.totalorder %s128, %s130
      %p137 = scmp.eq.s32.totalorder %s36, 1
      %p138 = por %p136, %p137
      %p139 = scmp.ne.s32.totalorder %s130, %s131
      %p140 = scmp.eq.s32.totalorder %s36, 0
      %p141 = por %p139, %p140
      %p142 = scmp.ne.s32.totalorder %s130, %s131
      %p143 = scmp.eq.s32.totalorder %s37, 1
      %p144 = por %p142, %p143
      %p146 = scmp.ne.s32.totalorder %s131, %s145
      %p147 = scmp.eq.s32.totalorder %s37, 0
      %p148 = por %p146, %p147
      %s150 = sadd.s32 %s149, 1
      %p153 = scmp.eq.s32.totalorder %s31, 1
      %p154 = scmp.ne.s32.totalorder %s149, %s151
      %p155 = scmp.eq.s32.totalorder %s31, 0
      %p156 = por %p154, %p155
      %p157 = scmp.ne.s32.totalorder %s149, %s151
      %p158 = scmp.eq.s32.totalorder %s36, 1
      %p159 = por %p157, %p158
      %p160 = scmp.ne.s32.totalorder %s151, %s152
      %p161 = scmp.eq.s32.totalorder %s36, 0
      %p162 = por %p160, %p161
      %p163 = scmp.ne.s32.totalorder %s151, %s152
      %p164 = scmp.eq.s32.totalorder %s37, 1
      %p165 = por %p163, %p164
      %p167 = scmp.ne.s32.totalorder %s152, %s166
      %p168 = scmp.eq.s32.totalorder %s37, 0
      %p169 = por %p167, %p168
      %s171 = sadd.s32 %s170, 1
      %p174 = scmp.eq.s32.totalorder %s31, 1
      %p175 = scmp.ne.s32.totalorder %s170, %s172
      %p176 = scmp.eq.s32.totalorder %s31, 0
      %p177 = por %p175, %p176
      %p178 = scmp.ne.s32.totalorder %s170, %s172
      %p179 = scmp.eq.s32.totalorder %s36, 1
      %p180 = por %p178, %p179
      %p181 = scmp.ne.s32.totalorder %s172, %s173
      %p182 = scmp.eq.s32.totalorder %s36, 0
      %p183 = por %p181, %p182
      %p184 = scmp.ne.s32.totalorder %s172, %s173
      %p185 = scmp.eq.s32.totalorder %s37, 1
      %p186 = por %p184, %p185
      %p188 = scmp.ne.s32.totalorder %s173, %s187
      %p189 = scmp.eq.s32.totalorder %s37, 0
      %p190 = por %p188, %p189
      %s192 = sadd.s32 %s191, 1
      %p195 = scmp.eq.s32.totalorder %s31, 1
      %p196 = scmp.ne.s32.totalorder %s191, %s193
      %p197 = scmp.eq.s32.totalorder %s31, 0
      %p198 = por %p196, %p197
      %p199 = scmp.ne.s32.totalorder %s191, %s193
      %p200 = scmp.eq.s32.totalorder %s36, 1
      %p201 = por %p199, %p200
      %p202 = scmp.ne.s32.totalorder %s193, %s194
      %p203 = scmp.eq.s32.totalorder %s36, 0
      %p204 = por %p202, %p203
      %p205 = scmp.ne.s32.totalorder %s193, %s194
      %p206 = scmp.eq.s32.totalorder %s37, 1
      %p207 = por %p205, %p206
      %p209 = scmp.ne.s32.totalorder %s194, %s208
      %p210 = scmp.eq.s32.totalorder %s37, 0
      %p211 = por %p209, %p210
      %s213 = sadd.s32 %s212, 1
      %p216 = scmp.eq.s32.totalorder %s31, 1
      %p217 = scmp.ne.s32.totalorder %s212, %s214
      %p218 = scmp.eq.s32.totalorder %s31, 0
      %p219 = por %p217, %p218
      %p220 = scmp.ne.s32.totalorder %s212, %s214
      %p221 = scmp.eq.s32.totalorder %s36, 1
      %p222 = por %p220, %p221
      %p223 = scmp.ne.s32.totalorder %s214, %s215
      %p224 = scmp.eq.s32.totalorder %s36, 0
      %p225 = por %p223, %p224
      %p226 = scmp.ne.s32.totalorder %s214, %s215
      %p227 = scmp.eq.s32.totalorder %s37, 1
      %p228 = por %p226, %p227
      %p230 = scmp.ne.s32.totalorder %s215, %s229
      %p231 = scmp.eq.s32.totalorder %s37, 0
      %p232 = por %p230, %p231
      %s234 = sadd.s32 %s233, 1
      %p237 = scmp.eq.s32.totalorder %s31, 1
      %p238 = scmp.ne.s32.totalorder %s233, %s235
      %p239 = scmp.eq.s32.totalorder %s31, 0
      %p240 = por %p238, %p239
      %p241 = scmp.ne.s32.totalorder %s233, %s235
      %p242 = scmp.eq.s32.totalorder %s36, 1
      %p243 = por %p241, %p242
      %p244 = scmp.ne.s32.totalorder %s235, %s236
      %p245 = scmp.eq.s32.totalorder %s36, 0
      %p246 = por %p244, %p245
      %p247 = scmp.ne.s32.totalorder %s235, %s236
      %p248 = scmp.eq.s32.totalorder %s37, 1
      %p249 = por %p247, %p248
      %p251 = scmp.ne.s32.totalorder %s236, %s250
      %p252 = scmp.eq.s32.totalorder %s37, 0
      %p253 = por %p251, %p252
      %s254 = ssub.s32 %s31, %s38
      %p255 = scmp.eq.s32.totalorder %s254, 0
      %s257 = sadd.s32 %s256, 1
      %s258 = scalar_select %p255, %s256, %s257
      %p261 = pneg %p255
      %p262 = scmp.eq.s32.totalorder %s31, 1
      %p263 = por %p261, %p262
      %p264 = scmp.ne.s32.totalorder %s256, %s259
      %p265 = scmp.eq.s32.totalorder %s31, 0
      %p266 = por %p264, %p265
      %p267 = scmp.ne.s32.totalorder %s256, %s259
      %p268 = scmp.eq.s32.totalorder %s36, 1
      %p269 = por %p267, %p268
      %p270 = scmp.ne.s32.totalorder %s259, %s260
      %p271 = scmp.eq.s32.totalorder %s36, 0
      %p272 = por %p270, %p271
      %p273 = scmp.ne.s32.totalorder %s259, %s260
      %p274 = scmp.eq.s32.totalorder %s37, 1
      %p275 = por %p273, %p274
      %p277 = scmp.ne.s32.totalorder %s260, %s276
      %p278 = scmp.eq.s32.totalorder %s37, 0
      %p279 = por %p277, %p278
      %s280 = ssub.s32 %s31, %s38
      %p281 = scmp.eq.s32.totalorder %s280, 0
      %s283 = sadd.s32 %s282, 1
      %s284 = scalar_select %p281, %s282, %s283
      %p287 = pneg %p281
      %p288 = scmp.eq.s32.totalorder %s31, 1
      %p289 = por %p287, %p288
      %p290 = scmp.ne.s32.totalorder %s282, %s285
      %p291 = scmp.eq.s32.totalorder %s31, 0
      %p292 = por %p290, %p291
      %p293 = scmp.ne.s32.totalorder %s282, %s285
      %p294 = scmp.eq.s32.totalorder %s36, 1
      %p295 = por %p293, %p294
      %p296 = scmp.ne.s32.totalorder %s285, %s286
      %p297 = scmp.eq.s32.totalorder %s36, 0
      %p298 = por %p296, %p297
      %p299 = scmp.ne.s32.totalorder %s285, %s286
      %p300 = scmp.eq.s32.totalorder %s37, 1
      %p301 = por %p299, %p300
      %p303 = scmp.ne.s32.totalorder %s286, %s302
      %p304 = scmp.eq.s32.totalorder %s37, 0
      %p305 = por %p303, %p304
      %s306 = ssub.s32 %s31, %s38
      %p307 = scmp.eq.s32.totalorder %s306, 0
      %s309 = sadd.s32 %s308, 1
      %s310 = scalar_select %p307, %s308, %s309
      %p313 = pneg %p307
      %p314 = scmp.eq.s32.totalorder %s31, 1
      %p315 = por %p313, %p314
      %p316 = scmp.ne.s32.totalorder %s308, %s311
      %p317 = scmp.eq.s32.totalorder %s31, 0
      %p318 = por %p316, %p317
      %p319 = scmp.ne.s32.totalorder %s308, %s311
      %p320 = scmp.eq.s32.totalorder %s36, 1
      %p321 = por %p319, %p320
      %p322 = scmp.ne.s32.totalorder %s311, %s312
      %p323 = scmp.eq.s32.totalorder %s36, 0
      %p324 = por %p322, %p323
      %p325 = scmp.ne.s32.totalorder %s311, %s312
      %p326 = scmp.eq.s32.totalorder %s37, 1
      %p327 = por %p325, %p326
      %p329 = scmp.ne.s32.totalorder %s312, %s328
      %p330 = scmp.eq.s32.totalorder %s37, 0
      %p331 = por %p329, %p330
      %p332 = scmp.le.s32.totalorder 1, %s31
      %p333 = scmp.lt.s32.totalorder %s31, 3
      %p334 = pnand %p332, %p333
      %p335 = pneg %p334
      // Predicated region
      $region9: #{tpu_custom_call.1} parent=5 // pred_check
        _
      $region10: #{tpu_custom_call.1} parent=5 // pred_check_branch
        %337 = sbr.rel (%p334) target = $region12
      $region11: #{tpu_custom_call.1} parent=5 // pred_region
        %s338 = ssub.s32 %s31, 1
        // Predicated region
        $region13: #{tpu_custom_call.1} parent=11 // pred_check
          %p339 = pneg %p78
        $region14: #{tpu_custom_call.1} parent=11 // pred_check_branch
          %341 = sbr.rel (%p339) target = $region16
        $region15: #{tpu_custom_call.1} parent=11 // pred_region
          %343 = vsyncadd [#allocation6], 0
          %s344 = sshll.u32 %s1, 4
          %s345 = int_to_ptr.hbm [resolvable:$true] %s344
          %s346 = sshll.u32 [#allocation5], 4
          %s347 = int_to_ptr.vmem [resolvable:$true] %s346
          %352 = dma.hbm_to_vmem [thread:$0]  %s345, 2048, %s347, [#allocation6], 64, 64, 4
        $region16: #{tpu_custom_call.1} parent=11 // pred_fallthru
          _
        // Predicated region
        $region17: #{tpu_custom_call.1} parent=11 // pred_check
          %p353 = pneg %p99
        $region18: #{tpu_custom_call.1} parent=11 // pred_check_branch
          %355 = sbr.rel (%p353) target = $region20
        $region19: #{tpu_custom_call.1} parent=11 // pred_region
          _
        $region20: #{tpu_custom_call.1} parent=11 // pred_fallthru
          _
        // Predicated region
        $region21: #{tpu_custom_call.1} parent=11 // pred_check
          %p356 = pneg %p120
        $region22: #{tpu_custom_call.1} parent=11 // pred_check_branch
          %358 = sbr.rel (%p356) target = $region24
        $region23: #{tpu_custom_call.1} parent=11 // pred_region
          %360 = vsyncadd [#allocation6], 0
          %s361 = sshll.u32 %s3, 4
          %s362 = int_to_ptr.hbm [resolvable:$true] %s361
          %s363 = sshll.u32 [#allocation7], 4
          %s364 = int_to_ptr.vmem [resolvable:$true] %s363
          %369 = dma.hbm_to_vmem [thread:$0]  %s362, 1024, %s364, [#allocation6], 64, 64, 4
        $region24: #{tpu_custom_call.1} parent=11 // pred_fallthru
          _
        // Predicated region
        $region25: #{tpu_custom_call.1} parent=11 // pred_check
          %p370 = pneg %p141
        $region26: #{tpu_custom_call.1} parent=11 // pred_check_branch
          %372 = sbr.rel (%p370) target = $region28
        $region27: #{tpu_custom_call.1} parent=11 // pred_region
          %374 = vsyncadd [#allocation9], 0
          %s376 = sshll.u32 %s4, 4
          %s377 = int_to_ptr.hbm [resolvable:$true] %s376
          %s378 = sshll.u32 [#allocation8], 4
          %s379 = int_to_ptr.vmem [resolvable:$true] %s378
          %381 = dma.hbm_to_vmem [thread:$0]  %s377, 16, %s379, [#allocation9]
        $region28: #{tpu_custom_call.1} parent=11 // pred_fallthru
          _
        // Predicated region
        $region29: #{tpu_custom_call.1} parent=11 // pred_check
          %p382 = pneg %p162
        $region30: #{tpu_custom_call.1} parent=11 // pred_check_branch
          %384 = sbr.rel (%p382) target = $region32
        $region31: #{tpu_custom_call.1} parent=11 // pred_region
          %386 = vsyncadd [#allocation9], 0
          %s387 = sshll.u32 %s5, 4
          %s388 = int_to_ptr.hbm [resolvable:$true] %s387
          %s389 = sshll.u32 [#allocation10], 4
          %s390 = int_to_ptr.vmem [resolvable:$true] %s389
          %395 = dma.hbm_to_vmem [thread:$0]  %s388, 1024, %s390, [#allocation9], 64, 64, 4
        $region32: #{tpu_custom_call.1} parent=11 // pred_fallthru
          _
        // Predicated region
        $region33: #{tpu_custom_call.1} parent=11 // pred_check
          %p396 = pneg %p183
        $region34: #{tpu_custom_call.1} parent=11 // pred_check_branch
          %398 = sbr.rel (%p396) target = $region36
        $region35: #{tpu_custom_call.1} parent=11 // pred_region
          _
        $region36: #{tpu_custom_call.1} parent=11 // pred_fallthru
          _
        // Predicated region
        $region37: #{tpu_custom_call.1} parent=11 // pred_check
          %p399 = pneg %p204
        $region38: #{tpu_custom_call.1} parent=11 // pred_check_branch
          %401 = sbr.rel (%p399) target = $region40
        $region39: #{tpu_custom_call.1} parent=11 // pred_region
          %403 = vsyncadd [#allocation12], 0
          %s404 = sshll.u32 %s7, 4
          %s405 = int_to_ptr.hbm [resolvable:$true] %s404
          %s406 = sshll.u32 [#allocation11], 4
          %s407 = int_to_ptr.vmem [resolvable:$true] %s406
          %412 = dma.hbm_to_vmem [thread:$0]  %s405, 2048, %s407, [#allocation12], 128, 128, 8
        $region40: #{tpu_custom_call.1} parent=11 // pred_fallthru
          _
        // Predicated region
        $region41: #{tpu_custom_call.1} parent=11 // pred_check
          %p413 = pneg %p225
        $region42: #{tpu_custom_call.1} parent=11 // pred_check_branch
          %415 = sbr.rel (%p413) target = $region44
        $region43: #{tpu_custom_call.1} parent=11 // pred_region
          _
        $region44: #{tpu_custom_call.1} parent=11 // pred_fallthru
          _
        // Predicated region
        $region45: #{tpu_custom_call.1} parent=11 // pred_check
          %p416 = pneg %p246
        $region46: #{tpu_custom_call.1} parent=11 // pred_check_branch
          %418 = sbr.rel (%p416) target = $region48
        $region47: #{tpu_custom_call.1} parent=11 // pred_region
          _
        $region48: #{tpu_custom_call.1} parent=11 // pred_fallthru
          _
      $region12: #{tpu_custom_call.1} parent=5 // pred_fallthru
        _
      %p419 = scmp.lt.s32.totalorder %s31, 2
      // Predicated region
      $region49: #{tpu_custom_call.1} parent=5 // pred_check
        %p420 = pneg %p419
      $region50: #{tpu_custom_call.1} parent=5 // pred_check_branch
        %422 = sbr.rel (%p420) target = $region52
      $region51: #{tpu_custom_call.1} parent=5 // pred_region
        // Predicated region
        $region53: #{tpu_custom_call.1} parent=51 // pred_check
          %p423 = pneg %p51
        $region54: #{tpu_custom_call.1} parent=51 // pred_check_branch
          %425 = sbr.rel (%p423) target = $region56
        $region55: #{tpu_custom_call.1} parent=51 // pred_region
          %s426 = sand.u32 %s41, 1
          %s427 = scalar_lea.sflag [#allocation3], %s426
          %s428 = sand.u32 %s41, 1
          %s429 = smul.addr %s428, 32
          %s430 = scalar_lea.vmem [#allocation2], %s429
          %s431 = smul.u32 2, %s31
          %433 = vsyncadd %s427, 0
          %s434 = smul.addr %s431, 2
          %s435 = smul.addr %s434, 8
          %s436 = scalar_lea.hbm %s0, %s435
          %s437 = sshll.u32 %s436, 4
          %s438 = int_to_ptr.hbm [resolvable:$true] %s437
          %s439 = sshll.u32 %s430, 4
          %s440 = int_to_ptr.vmem [resolvable:$true] %s439
          %445 = dma.hbm_to_vmem [thread:$0]  %s438, 512, %s440, %s427, 256, 256, 16
        $region56: #{tpu_custom_call.1} parent=51 // pred_fallthru
          _
      $region52: #{tpu_custom_call.1} parent=5 // pred_fallthru
        _
      %p446 = scmp.le.s32.totalorder 1, %s31
      %p447 = scmp.lt.s32.totalorder %s31, 3
      %p448 = pnand %p446, %p447
      %p449 = pneg %p448
      // Predicated region
      $region57: #{tpu_custom_call.1} parent=5 // pred_check
        _
      $region58: #{tpu_custom_call.1} parent=5 // pred_check_branch
        %451 = sbr.rel (%p448) target = $region60
      $region59: #{tpu_custom_call.1} parent=5 // pred_region
        %s452 = ssub.s32 %s31, 1
        %s453 = sand.u32 %s44, 1
        %s454 = scalar_lea.sflag [#allocation3], %s453
        %s455 = sand.u32 %s44, 1
        %s456 = smul.addr %s455, 32
        %s457 = scalar_lea.vmem [#allocation2], %s456
        // Predicated region
        $region61: #{tpu_custom_call.1} parent=59 // pred_check
          %p458 = pneg %p57
        $region62: #{tpu_custom_call.1} parent=59 // pred_check_branch
          %460 = sbr.rel (%p458) target = $region64
        $region63: #{tpu_custom_call.1} parent=59 // pred_region
          %462 = dma.done %s454, 512
        $region64: #{tpu_custom_call.1} parent=59 // pred_fallthru
          _
        // Predicated region
        $region65: #{tpu_custom_call.1} parent=59 // pred_check
          %p463 = pneg %p78
        $region66: #{tpu_custom_call.1} parent=59 // pred_check_branch
          %465 = sbr.rel (%p463) target = $region68
        $region67: #{tpu_custom_call.1} parent=59 // pred_region
          %467 = dma.done [#allocation6], 2048
        $region68: #{tpu_custom_call.1} parent=59 // pred_fallthru
          _
        // Predicated region
        $region69: #{tpu_custom_call.1} parent=59 // pred_check
          %p468 = pneg %p120
        $region70: #{tpu_custom_call.1} parent=59 // pred_check_branch
          %470 = sbr.rel (%p468) target = $region72
        $region71: #{tpu_custom_call.1} parent=59 // pred_region
          %472 = dma.done [#allocation6], 1024
        $region72: #{tpu_custom_call.1} parent=59 // pred_fallthru
          _
        // Predicated region
        $region73: #{tpu_custom_call.1} parent=59 // pred_check
          %p473 = pneg %p141
        $region74: #{tpu_custom_call.1} parent=59 // pred_check_branch
          %475 = sbr.rel (%p473) target = $region76
        $region75: #{tpu_custom_call.1} parent=59 // pred_region
          %477 = dma.done [#allocation9], 16
        $region76: #{tpu_custom_call.1} parent=59 // pred_fallthru
          _
        // Predicated region
        $region77: #{tpu_custom_call.1} parent=59 // pred_check
          %p478 = pneg %p162
        $region78: #{tpu_custom_call.1} parent=59 // pred_check_branch
          %480 = sbr.rel (%p478) target = $region80
        $region79: #{tpu_custom_call.1} parent=59 // pred_region
          %482 = dma.done [#allocation9], 1024
        $region80: #{tpu_custom_call.1} parent=59 // pred_fallthru
          _
        // Predicated region
        $region81: #{tpu_custom_call.1} parent=59 // pred_check
          %p483 = pneg %p204
        $region82: #{tpu_custom_call.1} parent=59 // pred_check_branch
          %485 = sbr.rel (%p483) target = $region84
        $region83: #{tpu_custom_call.1} parent=59 // pred_region
          %487 = dma.done [#allocation12], 2048
        $region84: #{tpu_custom_call.1} parent=59 // pred_fallthru
          _
        %s488 = sand.u32 %s44, 1
        %s489 = scalar_lea.sflag [#allocation3], %s488
        %s490 = sand.u32 %s44, 1
        %s491 = smul.addr %s490, 32
        %s492 = scalar_lea.vmem [#allocation2], %s491
        %p493 = pneg %p57
        %p494 = pneg %p54
        %p495 = pneg %p78
        %p496 = pneg %p75
        %p497 = pneg %p99
        %p498 = pneg %p96
        %p499 = pneg %p120
        %p500 = pneg %p117
        %p501 = pneg %p141
        %p502 = pneg %p138
        %p503 = pneg %p162
        %p504 = pneg %p159
        %p505 = pneg %p183
        %p506 = pneg %p180
        %p507 = pneg %p204
        %p508 = pneg %p201
        %p509 = pneg %p225
        %p510 = pneg %p222
        %p511 = pneg %p246
        %p512 = pneg %p243
        %p513 = pneg %p272
        %p514 = pneg %p269
        %s515 = sand.u32 %s259, 1
        %s516 = scalar_lea.sflag [#allocation4], %s515
        %s517 = sand.u32 %s259, 1
        %s518 = smul.addr %s517, 32
        %s519 = scalar_lea.vmem [#allocation13], %s518
        %p520 = pneg %p298
        %p521 = pneg %p295
        %s522 = sand.u32 %s36, 1
        %s523 = scalar_lea.sflag [#allocation15], %s522
        %s524 = sand.u32 %s285, 1
        %s525 = smul.addr %s524, 16
        %s526 = scalar_lea.vmem [#allocation14], %s525
        %p527 = pneg %p324
        %p528 = pneg %p321
        %s529 = sand.u32 %s36, 1
        %s530 = scalar_lea.sflag [#allocation15], %s529
        %s531 = sand.u32 %s311, 1
        %s532 = smul.addr %s531, 16
        %s533 = scalar_lea.vmem [#allocation16], %s532
        %s534 = smul.u32 2, %s36
        %s535 = smul.u32 2, %s36
        %s536 = smul.u32 2, %s36
        %s537 = smul.u32 2, %s36
        %v538 = vld [vmem:[%s457] sm:$0xff]
        %v539 = vld [vmem:[%s457 + $0x8] sm:$0xff]
        %v540 = vld [vmem:[%s457 + $0x10] sm:$0xff]
        %v541 = vld [vmem:[%s457 + $0x18] sm:$0xff]
        %v542 = vpack.c.bf16 %v540, %v538
        %v543 = vpack.c.bf16 %v541, %v539
        %v544 = vld [vmem:[#allocation5] sm:$0xf]
        %v545 = vld [vmem:[#allocation5 + $0x4] sm:$0xf]
        %v546 = vld [vmem:[#allocation5 + $0x8] sm:$0xf]
        %v547 = vld [vmem:[#allocation5 + $0xc] sm:$0xf]
        %v548 = vld [vmem:[#allocation5 + $0x10] sm:$0xf]
        %v549 = vld [vmem:[#allocation5 + $0x14] sm:$0xf]
        %v550 = vld [vmem:[#allocation5 + $0x18] sm:$0xf]
        %v551 = vld [vmem:[#allocation5 + $0x1c] sm:$0xf]
        %v552 = vld [vmem:[#allocation5 + $0x20] sm:$0xf]
        %v553 = vld [vmem:[#allocation5 + $0x24] sm:$0xf]
        %v554 = vld [vmem:[#allocation5 + $0x28] sm:$0xf]
        %v555 = vld [vmem:[#allocation5 + $0x2c] sm:$0xf]
        %v556 = vld [vmem:[#allocation5 + $0x30] sm:$0xf]
        %v557 = vld [vmem:[#allocation5 + $0x34] sm:$0xf]
        %v558 = vld [vmem:[#allocation5 + $0x38] sm:$0xf]
        %v559 = vld [vmem:[#allocation5 + $0x3c] sm:$0xf]
        %v560 = vld [vmem:[#allocation5 + $0x40] sm:$0xf]
        %v561 = vld [vmem:[#allocation5 + $0x44] sm:$0xf]
        %v562 = vld [vmem:[#allocation5 + $0x48] sm:$0xf]
        %v563 = vld [vmem:[#allocation5 + $0x4c] sm:$0xf]
        %v564 = vld [vmem:[#allocation5 + $0x50] sm:$0xf]
        %v565 = vld [vmem:[#allocation5 + $0x54] sm:$0xf]
        %v566 = vld [vmem:[#allocation5 + $0x58] sm:$0xf]
        %v567 = vld [vmem:[#allocation5 + $0x5c] sm:$0xf]
        %v568 = vld [vmem:[#allocation5 + $0x60] sm:$0xf]
        %v569 = vld [vmem:[#allocation5 + $0x64] sm:$0xf]
        %v570 = vld [vmem:[#allocation5 + $0x68] sm:$0xf]
        %v571 = vld [vmem:[#allocation5 + $0x6c] sm:$0xf]
        %v572 = vld [vmem:[#allocation5 + $0x70] sm:$0xf]
        %v573 = vld [vmem:[#allocation5 + $0x74] sm:$0xf]
        %v574 = vld [vmem:[#allocation5 + $0x78] sm:$0xf]
        %v575 = vld [vmem:[#allocation5 + $0x7c] sm:$0xf]
        %v576 = vld [vmem:[%s2] sm:$0x1]
        %v578 = vperm.slane %v576, 0
        %v612 = vunpack.c.l.b16 %v544
        %v613 = vunpack.c.l.b16 %v545
        %v614 = vunpack.c.l.b16 %v546
        %v615 = vunpack.c.l.b16 %v547
        %v616 = vunpack.c.l.b16 %v548
        %v617 = vunpack.c.l.b16 %v549
        %v618 = vunpack.c.l.b16 %v550
        %v619 = vunpack.c.l.b16 %v551
        %v620 = vunpack.c.l.b16 %v552
        %v621 = vunpack.c.l.b16 %v553
        %v622 = vunpack.c.l.b16 %v554
        %v623 = vunpack.c.l.b16 %v555
        %v624 = vunpack.c.l.b16 %v556
        %v625 = vunpack.c.l.b16 %v557
        %v626 = vunpack.c.l.b16 %v558
        %v627 = vunpack.c.l.b16 %v559
        %v628 = vunpack.c.l.b16 %v560
        %v629 = vunpack.c.l.b16 %v561
        %v630 = vunpack.c.l.b16 %v562
        %v631 = vunpack.c.l.b16 %v563
        %v632 = vunpack.c.l.b16 %v564
        %v633 = vunpack.c.l.b16 %v565
        %v634 = vunpack.c.l.b16 %v566
        %v635 = vunpack.c.l.b16 %v567
        %v636 = vunpack.c.l.b16 %v568
        %v637 = vunpack.c.l.b16 %v569
        %v638 = vunpack.c.l.b16 %v570
        %v639 = vunpack.c.l.b16 %v571
        %v640 = vunpack.c.l.b16 %v572
        %v641 = vunpack.c.l.b16 %v573
        %v642 = vunpack.c.l.b16 %v574
        %v643 = vunpack.c.l.b16 %v575
        %v644 = vpack.c.b16 %v613, %v612
        %v645 = vpack.c.b16 %v615, %v614
        %v646 = vpack.c.b16 %v617, %v616
        %v647 = vpack.c.b16 %v619, %v618
        %v648 = vpack.c.b16 %v621, %v620
        %v649 = vpack.c.b16 %v623, %v622
        %v650 = vpack.c.b16 %v625, %v624
        %v651 = vpack.c.b16 %v627, %v626
        %v652 = vpack.c.b16 %v629, %v628
        %v653 = vpack.c.b16 %v631, %v630
        %v654 = vpack.c.b16 %v633, %v632
        %v655 = vpack.c.b16 %v635, %v634
        %v656 = vpack.c.b16 %v637, %v636
        %v657 = vpack.c.b16 %v639, %v638
        %v658 = vpack.c.b16 %v641, %v640
        %v659 = vpack.c.b16 %v643, %v642
        %676 = vmatpush.bf16.msra.mxu0 %v651
        %677 = vmatpush.bf16.msra.mxu0 %v650
        %678 = vmatpush.bf16.msra.mxu0 %v649
        %679 = vmatpush.bf16.msra.mxu0 %v648
        %680 = vmatpush.bf16.msra.mxu0 %v647
        %681 = vmatpush.bf16.msra.mxu0 %v646
        %682 = vmatpush.bf16.msra.mxu0 %v645
        %683 = vmatpush.bf16.msra.mxu0 %v644
        %684 = vmatmul.bf16.gmra.mxu0 %v542
        %v685 = vpop.f32.mrf.mxu0
        %v686 = vadd.f32 %v578, %v685
        %v687 = vpop.f32.mrf.mxu0
        %v688 = vadd.f32 %v578, %v687
        %689 = vdwg.mxu0
        %690 = vmatpush.bf16.msra.mxu0 %v659
        %691 = vmatpush.bf16.msra.mxu0 %v658
        %692 = vmatpush.bf16.msra.mxu0 %v657
        %693 = vmatpush.bf16.msra.mxu0 %v656
        %694 = vmatpush.bf16.msra.mxu0 %v655
        %695 = vmatpush.bf16.msra.mxu0 %v654
        %696 = vmatpush.bf16.msra.mxu0 %v653
        %697 = vmatpush.bf16.msra.mxu0 %v652
        %698 = vmatmul.bf16.gmra.mxu0 %v543
        %v699 = vpop.f32.mrf.mxu0
        %v700 = vadd.f32 %v686, %v699
        %v701 = vpop.f32.mrf.mxu0
        %v702 = vadd.f32 %v688, %v701
        %703 = vdwg.mxu0
        %v704 = vmax.f32 %v700, 0.0
        %v705 = vmax.f32 %v702, 0.0
        %v706 = vpack.c.bf16 %v705, %v704
        %v707 = vld [vmem:[#allocation7] sm:$0xf]
        %v708 = vld [vmem:[#allocation7 + $0x4] sm:$0xf]
        %v709 = vld [vmem:[#allocation7 + $0x8] sm:$0xf]
        %v710 = vld [vmem:[#allocation7 + $0xc] sm:$0xf]
        %v711 = vld [vmem:[#allocation7 + $0x10] sm:$0xf]
        %v712 = vld [vmem:[#allocation7 + $0x14] sm:$0xf]
        %v713 = vld [vmem:[#allocation7 + $0x18] sm:$0xf]
        %v714 = vld [vmem:[#allocation7 + $0x1c] sm:$0xf]
        %v715 = vld [vmem:[#allocation7 + $0x20] sm:$0xf]
        %v716 = vld [vmem:[#allocation7 + $0x24] sm:$0xf]
        %v717 = vld [vmem:[#allocation7 + $0x28] sm:$0xf]
        %v718 = vld [vmem:[#allocation7 + $0x2c] sm:$0xf]
        %v719 = vld [vmem:[#allocation7 + $0x30] sm:$0xf]
        %v720 = vld [vmem:[#allocation7 + $0x34] sm:$0xf]
        %v721 = vld [vmem:[#allocation7 + $0x38] sm:$0xf]
        %v722 = vld [vmem:[#allocation7 + $0x3c] sm:$0xf]
        %v723 = vld [vmem:[#allocation8] sm:$0x1]
        %v725 = vperm.slane %v723, 0
        %v743 = vunpack.c.l.b16 %v707
        %v744 = vunpack.c.l.b16 %v708
        %v745 = vunpack.c.l.b16 %v709
        %v746 = vunpack.c.l.b16 %v710
        %v747 = vunpack.c.l.b16 %v711
        %v748 = vunpack.c.l.b16 %v712
        %v749 = vunpack.c.l.b16 %v713
        %v750 = vunpack.c.l.b16 %v714
        %v751 = vunpack.c.l.b16 %v715
        %v752 = vunpack.c.l.b16 %v716
        %v753 = vunpack.c.l.b16 %v717
        %v754 = vunpack.c.l.b16 %v718
        %v755 = vunpack.c.l.b16 %v719
        %v756 = vunpack.c.l.b16 %v720
        %v757 = vunpack.c.l.b16 %v721
        %v758 = vunpack.c.l.b16 %v722
        %v759 = vpack.c.b16 %v744, %v743
        %v760 = vpack.c.b16 %v746, %v745
        %v761 = vpack.c.b16 %v748, %v747
        %v762 = vpack.c.b16 %v750, %v749
        %v763 = vpack.c.b16 %v752, %v751
        %v764 = vpack.c.b16 %v754, %v753
        %v765 = vpack.c.b16 %v756, %v755
        %v766 = vpack.c.b16 %v758, %v757
        %775 = vmatpush.bf16.msra.mxu0 %v766
        %776 = vmatpush.bf16.msra.mxu0 %v765
        %777 = vmatpush.bf16.msra.mxu0 %v764
        %778 = vmatpush.bf16.msra.mxu0 %v763
        %779 = vmatpush.bf16.msra.mxu0 %v762
        %780 = vmatpush.bf16.msra.mxu0 %v761
        %781 = vmatpush.bf16.msra.mxu0 %v760
        %782 = vmatpush.bf16.msra.mxu0 %v759
        %783 = vmatmul.bf16.gmra.mxu0 %v706
        %v784 = vpop.f32.mrf.mxu0
        %v785 = vadd.f32 %v725, %v784
        %v786 = vpop.f32.mrf.mxu0
        %v787 = vadd.f32 %v725, %v786
        %788 = vdwg.mxu0
        %v789 = vmax.f32 %v785, 0.0
        %v790 = vmax.f32 %v787, 0.0
        %v791 = vld [vmem:[%s9] sm:$0x1]
        %v793 = vperm.slane %v791, 0
        %v795 = vadd.f32 %v789, %v793
        %v796 = vadd.f32 %v790, %v793
        %vm797 = vcmp.gt.f32.partialorder %v795, 1.0
        %vm798 = vcmp.gt.f32.partialorder %v796, 1.0
        %v799 = vsel %vm797, 1, 0
        %v800 = vsel %vm798, 1, 0
        %v801 = vcvt.s32.f32 %v799
        %v802 = vcvt.s32.f32 %v800
        %v803 = vpack.c.bf16 %v802, %v801
        %v804 = vld [vmem:[#allocation10] sm:$0xf]
        %v805 = vld [vmem:[#allocation10 + $0x4] sm:$0xf]
        %v806 = vld [vmem:[#allocation10 + $0x8] sm:$0xf]
        %v807 = vld [vmem:[#allocation10 + $0xc] sm:$0xf]
        %v808 = vld [vmem:[#allocation10 + $0x10] sm:$0xf]
        %v809 = vld [vmem:[#allocation10 + $0x14] sm:$0xf]
        %v810 = vld [vmem:[#allocation10 + $0x18] sm:$0xf]
        %v811 = vld [vmem:[#allocation10 + $0x1c] sm:$0xf]
        %v812 = vld [vmem:[#allocation10 + $0x20] sm:$0xf]
        %v813 = vld [vmem:[#allocation10 + $0x24] sm:$0xf]
        %v814 = vld [vmem:[#allocation10 + $0x28] sm:$0xf]
        %v815 = vld [vmem:[#allocation10 + $0x2c] sm:$0xf]
        %v816 = vld [vmem:[#allocation10 + $0x30] sm:$0xf]
        %v817 = vld [vmem:[#allocation10 + $0x34] sm:$0xf]
        %v818 = vld [vmem:[#allocation10 + $0x38] sm:$0xf]
        %v819 = vld [vmem:[#allocation10 + $0x3c] sm:$0xf]
        %v820 = vld [vmem:[%s6] sm:$0x1]
        %v822 = vperm.slane %v820, 0
        %v840 = vunpack.c.l.b16 %v804
        %v841 = vunpack.c.l.b16 %v805
        %v842 = vunpack.c.l.b16 %v806
        %v843 = vunpack.c.l.b16 %v807
        %v844 = vunpack.c.l.b16 %v808
        %v845 = vunpack.c.l.b16 %v809
        %v846 = vunpack.c.l.b16 %v810
        %v847 = vunpack.c.l.b16 %v811
        %v848 = vunpack.c.l.b16 %v812
        %v849 = vunpack.c.l.b16 %v813
        %v850 = vunpack.c.l.b16 %v814
        %v851 = vunpack.c.l.b16 %v815
        %v852 = vunpack.c.l.b16 %v816
        %v853 = vunpack.c.l.b16 %v817
        %v854 = vunpack.c.l.b16 %v818
        %v855 = vunpack.c.l.b16 %v819
        %v856 = vpack.c.b16 %v841, %v840
        %v857 = vpack.c.b16 %v843, %v842
        %v858 = vpack.c.b16 %v845, %v844
        %v859 = vpack.c.b16 %v847, %v846
        %v860 = vpack.c.b16 %v849, %v848
        %v861 = vpack.c.b16 %v851, %v850
        %v862 = vpack.c.b16 %v853, %v852
        %v863 = vpack.c.b16 %v855, %v854
        %872 = vmatpush.bf16.msra.mxu0 %v863
        %873 = vmatpush.bf16.msra.mxu0 %v862
        %874 = vmatpush.bf16.msra.mxu0 %v861
        %875 = vmatpush.bf16.msra.mxu0 %v860
        %876 = vmatpush.bf16.msra.mxu0 %v859
        %877 = vmatpush.bf16.msra.mxu0 %v858
        %878 = vmatpush.bf16.msra.mxu0 %v857
        %879 = vmatpush.bf16.msra.mxu0 %v856
        %880 = vmatmul.bf16.gmra.mxu0 %v803
        %v881 = vpop.f32.mrf.mxu0
        %v882 = vadd.f32 %v822, %v881
        %v883 = vpop.f32.mrf.mxu0
        %v884 = vadd.f32 %v822, %v883
        %885 = vdwg.mxu0
        %v886 = vmax.f32 %v882, 0.0
        %v887 = vmax.f32 %v884, 0.0
        %v888 = vpack.c.bf16 %v887, %v886
        %v889 = vld [vmem:[#allocation11] sm:$0xff]
        %v890 = vld [vmem:[#allocation11 + $0x8] sm:$0xff]
        %v891 = vld [vmem:[#allocation11 + $0x10] sm:$0xff]
        %v892 = vld [vmem:[#allocation11 + $0x18] sm:$0xff]
        %v893 = vld [vmem:[#allocation11 + $0x20] sm:$0xff]
        %v894 = vld [vmem:[#allocation11 + $0x28] sm:$0xff]
        %v895 = vld [vmem:[#allocation11 + $0x30] sm:$0xff]
        %v896 = vld [vmem:[#allocation11 + $0x38] sm:$0xff]
        %v897 = vld [vmem:[#allocation11 + $0x40] sm:$0xff]
        %v898 = vld [vmem:[#allocation11 + $0x48] sm:$0xff]
        %v899 = vld [vmem:[#allocation11 + $0x50] sm:$0xff]
        %v900 = vld [vmem:[#allocation11 + $0x58] sm:$0xff]
        %v901 = vld [vmem:[#allocation11 + $0x60] sm:$0xff]
        %v902 = vld [vmem:[#allocation11 + $0x68] sm:$0xff]
        %v903 = vld [vmem:[#allocation11 + $0x70] sm:$0xff]
        %v904 = vld [vmem:[#allocation11 + $0x78] sm:$0xff]
        %v905 = vld [vmem:[%s8] sm:$0x3]
        %v907 = vperm.slane %v905, 0
        %v908 = vperm.slane %v905, 1
        %v927 = vunpack.c.l.b16 %v889
        %v928 = vunpack.c.h.b16 %v889
        %v929 = vunpack.c.l.b16 %v890
        %v930 = vunpack.c.h.b16 %v890
        %v931 = vunpack.c.l.b16 %v891
        %v932 = vunpack.c.h.b16 %v891
        %v933 = vunpack.c.l.b16 %v892
        %v934 = vunpack.c.h.b16 %v892
        %v935 = vunpack.c.l.b16 %v893
        %v936 = vunpack.c.h.b16 %v893
        %v937 = vunpack.c.l.b16 %v894
        %v938 = vunpack.c.h.b16 %v894
        %v939 = vunpack.c.l.b16 %v895
        %v940 = vunpack.c.h.b16 %v895
        %v941 = vunpack.c.l.b16 %v896
        %v942 = vunpack.c.h.b16 %v896
        %v943 = vunpack.c.l.b16 %v897
        %v944 = vunpack.c.h.b16 %v897
        %v945 = vunpack.c.l.b16 %v898
        %v946 = vunpack.c.h.b16 %v898
        %v947 = vunpack.c.l.b16 %v899
        %v948 = vunpack.c.h.b16 %v899
        %v949 = vunpack.c.l.b16 %v900
        %v950 = vunpack.c.h.b16 %v900
        %v951 = vunpack.c.l.b16 %v901
        %v952 = vunpack.c.h.b16 %v901
        %v953 = vunpack.c.l.b16 %v902
        %v954 = vunpack.c.h.b16 %v902
        %v955 = vunpack.c.l.b16 %v903
        %v956 = vunpack.c.h.b16 %v903
        %v957 = vunpack.c.l.b16 %v904
        %v958 = vunpack.c.h.b16 %v904
        %v959 = vpack.c.b16 %v929, %v927
        %v960 = vpack.c.b16 %v930, %v928
        %v961 = vpack.c.b16 %v933, %v931
        %v962 = vpack.c.b16 %v934, %v932
        %v963 = vpack.c.b16 %v937, %v935
        %v964 = vpack.c.b16 %v938, %v936
        %v965 = vpack.c.b16 %v941, %v939
        %v966 = vpack.c.b16 %v942, %v940
        %v967 = vpack.c.b16 %v945, %v943
        %v968 = vpack.c.b16 %v946, %v944
        %v969 = vpack.c.b16 %v949, %v947
        %v970 = vpack.c.b16 %v950, %v948
        %v971 = vpack.c.b16 %v953, %v951
        %v972 = vpack.c.b16 %v954, %v952
        %v973 = vpack.c.b16 %v957, %v955
        %v974 = vpack.c.b16 %v958, %v956
        %991 = vmatpush.bf16.msra.mxu0 %v973
        %992 = vmatpush.bf16.msra.mxu0 %v971
        %993 = vmatpush.bf16.msra.mxu0 %v969
        %994 = vmatpush.bf16.msra.mxu0 %v967
        %995 = vmatpush.bf16.msra.mxu0 %v965
        %996 = vmatpush.bf16.msra.mxu0 %v963
        %997 = vmatpush.bf16.msra.mxu0 %v961
        %998 = vmatpush.bf16.msra.mxu0 %v959
        %999 = vmatmul.bf16.gmra.mxu0 %v888
        %v1000 = vpop.f32.mrf.mxu0
        %v1001 = vadd.f32 %v907, %v1000
        %v1002 = vpop.f32.mrf.mxu0
        %v1003 = vadd.f32 %v907, %v1002
        %1004 = vdwg.mxu0
        %1005 = vmatpush.bf16.msra.mxu0 %v974
        %1006 = vmatpush.bf16.msra.mxu0 %v972
        %1007 = vmatpush.bf16.msra.mxu0 %v970
        %1008 = vmatpush.bf16.msra.mxu0 %v968
        %1009 = vmatpush.bf16.msra.mxu0 %v966
        %1010 = vmatpush.bf16.msra.mxu0 %v964
        %1011 = vmatpush.bf16.msra.mxu0 %v962
        %1012 = vmatpush.bf16.msra.mxu0 %v960
        %1013 = vmatmul.bf16.gmra.mxu0 %v888
        %v1014 = vpop.f32.mrf.mxu0
        %v1015 = vadd.f32 %v908, %v1014
        %v1016 = vpop.f32.mrf.mxu0
        %v1017 = vadd.f32 %v908, %v1016
        %1018 = vdwg.mxu0
        %v1019 = vxor.u32 %v1001, 2147483648
        %v1020 = vxor.u32 %v1015, 2147483648
        %v1021 = vxor.u32 %v1003, 2147483648
        %v1022 = vxor.u32 %v1017, 2147483648
        %v1023 = vmul.f32 %v1019, 1.442695
        %v1024 = vpow.pop %v1023
        %v1025 = vmul.f32 %v1020, 1.442695
        %v1026 = vpow.pop %v1025
        %v1027 = vmul.f32 %v1021, 1.442695
        %v1028 = vpow.pop %v1027
        %v1029 = vmul.f32 %v1022, 1.442695
        %v1030 = vpow.pop %v1029
        %v1031 = vadd.f32 %v1024, 1.0
        %v1032 = vadd.f32 %v1026, 1.0
        %v1033 = vadd.f32 %v1028, 1.0
        %v1034 = vadd.f32 %v1030, 1.0
        %v1035 = vrcp.pop %v1031
        %v1036 = vmul.f32 %v1031, %v1035
        %v1037 = vsub.f32 1.0, %v1036
        %v1038 = vmul.f32 %v1035, %v1037
        %v1039 = vadd.f32 %v1035, %v1038
        %vm1040 = vweird.f32 %v1031
        %vm1041 = vweird.f32 %v1035
        %vm1042 = vmor %vm1040, %vm1041
        %v1043 = vsel %vm1042, %v1035, %v1039
        %v1044 = vand.u32 2147483647, %v1031
        %vm1045 = vcmp.eq.f32.partialorder %v1044, 8.507059e+37
        %v1046 = vand.u32 %v1031, 2147483648
        %v1047 = vor.u32 1.1754944e-38, %v1046
        %v1048 = vsel %vm1045, %v1047, %v1043
        %v1049 = vmul.f32 1.0, %v1048
        %v1050 = vrcp.pop %v1032
        %v1051 = vmul.f32 %v1032, %v1050
        %v1052 = vsub.f32 1.0, %v1051
        %v1053 = vmul.f32 %v1050, %v1052
        %v1054 = vadd.f32 %v1050, %v1053
        %vm1055 = vweird.f32 %v1032
        %vm1056 = vweird.f32 %v1050
        %vm1057 = vmor %vm1055, %vm1056
        %v1058 = vsel %vm1057, %v1050, %v1054
        %v1059 = vand.u32 2147483647, %v1032
        %vm1060 = vcmp.eq.f32.partialorder %v1059, 8.507059e+37
        %v1061 = vand.u32 %v1032, 2147483648
        %v1062 = vor.u32 1.1754944e-38, %v1061
        %v1063 = vsel %vm1060, %v1062, %v1058
        %v1064 = vmul.f32 1.0, %v1063
        %v1065 = vrcp.pop %v1033
        %v1066 = vmul.f32 %v1033, %v1065
        %v1067 = vsub.f32 1.0, %v1066
        %v1068 = vmul.f32 %v1065, %v1067
        %v1069 = vadd.f32 %v1065, %v1068
        %vm1070 = vweird.f32 %v1033
        %vm1071 = vweird.f32 %v1065
        %vm1072 = vmor %vm1070, %vm1071
        %v1073 = vsel %vm1072, %v1065, %v1069
        %v1074 = vand.u32 2147483647, %v1033
        %vm1075 = vcmp.eq.f32.partialorder %v1074, 8.507059e+37
        %v1076 = vand.u32 %v1033, 2147483648
        %v1077 = vor.u32 1.1754944e-38, %v1076
        %v1078 = vsel %vm1075, %v1077, %v1073
        %v1079 = vmul.f32 1.0, %v1078
        %v1080 = vrcp.pop %v1034
        %v1081 = vmul.f32 %v1034, %v1080
        %v1082 = vsub.f32 1.0, %v1081
        %v1083 = vmul.f32 %v1080, %v1082
        %v1084 = vadd.f32 %v1080, %v1083
        %vm1085 = vweird.f32 %v1034
        %vm1086 = vweird.f32 %v1080
        %vm1087 = vmor %vm1085, %vm1086
        %v1088 = vsel %vm1087, %v1080, %v1084
        %v1089 = vand.u32 2147483647, %v1034
        %vm1090 = vcmp.eq.f32.partialorder %v1089, 8.507059e+37
        %v1091 = vand.u32 %v1034, 2147483648
        %v1092 = vor.u32 1.1754944e-38, %v1091
        %v1093 = vsel %vm1090, %v1092, %v1088
        %v1094 = vmul.f32 1.0, %v1093
        %1095 = vst [vmem:[%s519] sm:$0xff] %v1049
        %1096 = vst [vmem:[%s519 + $0x8] sm:$0xff] %v1064
        %1097 = vst [vmem:[%s519 + $0x10] sm:$0xff] %v1079
        %1098 = vst [vmem:[%s519 + $0x18] sm:$0xff] %v1094
        %vm1099 = vcmask 261120
        %1100 = vst.msk [vmem:[%s526] sm:$0xff] %vm1099, %v801
        %1101 = vst.msk [vmem:[%s526 + $0x8] sm:$0xff] %vm1099, %v802
        %1102 = vst.msk [vmem:[%s533] sm:$0xff] %vm1099, %v795
        %1103 = vst.msk [vmem:[%s533 + $0x8] sm:$0xff] %vm1099, %v796
        %s1104 = sand.u32 %s259, 1
        %s1105 = scalar_lea.sflag [#allocation4], %s1104
        %s1106 = sand.u32 %s259, 1
        %s1107 = smul.addr %s1106, 32
        %s1108 = scalar_lea.vmem [#allocation13], %s1107
        %s1109 = sand.u32 %s36, 1
        %s1110 = scalar_lea.sflag [#allocation15], %s1109
        %s1111 = sand.u32 %s285, 1
        %s1112 = smul.addr %s1111, 16
        %s1113 = scalar_lea.vmem [#allocation14], %s1112
        %s1114 = sand.u32 %s36, 1
        %s1115 = scalar_lea.sflag [#allocation15], %s1114
        %s1116 = sand.u32 %s311, 1
        %s1117 = smul.addr %s1116, 16
        %s1118 = scalar_lea.vmem [#allocation16], %s1117
        // Predicated region
        $region85: #{tpu_custom_call.1} parent=59 // pred_check
          %p1119 = pneg %p269
        $region86: #{tpu_custom_call.1} parent=59 // pred_check_branch
          %1121 = sbr.rel (%p1119) target = $region88
        $region87: #{tpu_custom_call.1} parent=59 // pred_region
          %s1122 = smul.u32 2, %s36
          %1124 = vsyncadd %s1105, 0
          %s1125 = smul.addr %s1122, 2
          %s1126 = smul.addr %s1125, 8
          %s1127 = scalar_lea.hbm %s10, %s1126
          %s1128 = sshll.u32 %s1108, 4
          %s1129 = int_to_ptr.vmem [resolvable:$true] %s1128
          %s1130 = sshll.u32 %s1127, 4
          %s1131 = int_to_ptr.hbm [resolvable:$true] %s1130
          %1136 = dma.vmem_to_hbm [thread:$0]  %s1129, 512, %s1131, %s1105, 256, 256, 16
        $region88: #{tpu_custom_call.1} parent=59 // pred_fallthru
          _
        // Predicated region
        $region89: #{tpu_custom_call.1} parent=59 // pred_check
          %p1137 = pneg %p295
        $region90: #{tpu_custom_call.1} parent=59 // pred_check_branch
          %1139 = sbr.rel (%p1137) target = $region92
        $region91: #{tpu_custom_call.1} parent=59 // pred_region
          %s1140 = smul.u32 2, %s36
          %1142 = vsyncadd %s1110, 0
          %s1143 = smul.addr %s1140, 8
          %s1144 = scalar_lea.hbm %s11, %s1143
          %s1145 = sshll.u32 %s1113, 4
          %s1146 = int_to_ptr.vmem [resolvable:$true] %s1145
          %s1147 = sshll.u32 %s1144, 4
          %s1148 = int_to_ptr.hbm [resolvable:$true] %s1147
          %1153 = dma.vmem_to_hbm [thread:$0]  %s1146, 256, %s1148, %s1110, 128, 128, 8
        $region92: #{tpu_custom_call.1} parent=59 // pred_fallthru
          _
        // Predicated region
        $region93: #{tpu_custom_call.1} parent=59 // pred_check
          %p1154 = pneg %p321
        $region94: #{tpu_custom_call.1} parent=59 // pred_check_branch
          %1156 = sbr.rel (%p1154) target = $region96
        $region95: #{tpu_custom_call.1} parent=59 // pred_region
          %s1157 = smul.u32 2, %s36
          %1159 = vsyncadd %s1115, 0
          %s1160 = smul.addr %s1157, 8
          %s1161 = scalar_lea.hbm %s12, %s1160
          %s1162 = sshll.u32 %s1118, 4
          %s1163 = int_to_ptr.vmem [resolvable:$true] %s1162
          %s1164 = sshll.u32 %s1161, 4
          %s1165 = int_to_ptr.hbm [resolvable:$true] %s1164
          %1170 = dma.vmem_to_hbm [thread:$0]  %s1163, 256, %s1165, %s1115, 128, 128, 8
        $region96: #{tpu_custom_call.1} parent=59 // pred_fallthru
          _
      $region60: #{tpu_custom_call.1} parent=5 // pred_fallthru
        _
      %p1171 = scmp.le.s32.totalorder 2, %s31
      // Predicated region
      $region97: #{tpu_custom_call.1} parent=5 // pred_check
        %p1172 = pneg %p1171
      $region98: #{tpu_custom_call.1} parent=5 // pred_check_branch
        %1174 = sbr.rel (%p1172) target = $region100
      $region99: #{tpu_custom_call.1} parent=5 // pred_region
        %s1175 = ssub.s32 %s31, 2
        // Predicated region
        $region101: #{tpu_custom_call.1} parent=99 // pred_check
          %p1176 = pneg %p275
        $region102: #{tpu_custom_call.1} parent=99 // pred_check_branch
          %1178 = sbr.rel (%p1176) target = $region104
        $region103: #{tpu_custom_call.1} parent=99 // pred_region
          %s1179 = sand.u32 %s260, 1
          %s1180 = scalar_lea.sflag [#allocation4], %s1179
          %s1181 = sand.u32 %s260, 1
          %s1182 = smul.addr %s1181, 32
          %s1183 = scalar_lea.vmem [#allocation13], %s1182
          %1185 = dma.done %s1180, 512
        $region104: #{tpu_custom_call.1} parent=99 // pred_fallthru
          _
        // Predicated region
        $region105: #{tpu_custom_call.1} parent=99 // pred_check
          %p1186 = pneg %p301
        $region106: #{tpu_custom_call.1} parent=99 // pred_check_branch
          %1188 = sbr.rel (%p1186) target = $region108
        $region107: #{tpu_custom_call.1} parent=99 // pred_region
          %s1189 = sand.u32 %s37, 1
          %s1190 = scalar_lea.sflag [#allocation15], %s1189
          %s1191 = sand.u32 %s286, 1
          %s1192 = smul.addr %s1191, 16
          %s1193 = scalar_lea.vmem [#allocation14], %s1192
          %1195 = dma.done %s1190, 256
        $region108: #{tpu_custom_call.1} parent=99 // pred_fallthru
          _
        // Predicated region
        $region109: #{tpu_custom_call.1} parent=99 // pred_check
          %p1196 = pneg %p327
        $region110: #{tpu_custom_call.1} parent=99 // pred_check_branch
          %1198 = sbr.rel (%p1196) target = $region112
        $region111: #{tpu_custom_call.1} parent=99 // pred_region
          %s1199 = sand.u32 %s37, 1
          %s1200 = scalar_lea.sflag [#allocation15], %s1199
          %s1201 = sand.u32 %s312, 1
          %s1202 = smul.addr %s1201, 16
          %s1203 = scalar_lea.vmem [#allocation16], %s1202
          %1205 = dma.done %s1200, 256
        $region112: #{tpu_custom_call.1} parent=99 // pred_fallthru
          _
      $region100: #{tpu_custom_call.1} parent=5 // pred_fallthru
        _
    $region6: #{tpu_custom_call.1} parent=1 // loop_footer
      %s35 = sadd.s32 1, %s31
    $region7: #{tpu_custom_call.1} parent=1 // loop_footer_branch
      %30 = sbr.rel target = $region3
    $region8: #{tpu_custom_call.1} parent=1 // loop_exit
      _
    %1206 = vsyncpa [#allocation3], 1
    %s1207 = scalar_lea.sflag [#allocation3], 1
    %1208 = vsyncpa %s1207, 1
    %1209 = vsyncpa [#allocation6], 1
    %1210 = vsyncpa [#allocation9], 1
    %1211 = vsyncpa [#allocation12], 1
    %1212 = vsyncpa [#allocation4], 1
    %s1213 = scalar_lea.sflag [#allocation4], 1
    %1214 = vsyncpa %s1213, 1
    %1215 = vsyncpa [#allocation15], 1
    %s1216 = scalar_lea.sflag [#allocation15], 1
    %1217 = vsyncpa %s1216, 1

</llo_original>
